<compile_context>
chip_gen: v5e
topology: v5e:2x2
jax: 0.10.0
libtpu: 0.0.40
codegen_flags: <defaults>
</compile_context>

<pallas_src>
import functools
import math

import jax
import jax.numpy as jnp
from jax import lax
from jax.experimental import pallas as pl
from jax.experimental.pallas import tpu as pltpu

_MASK_VALUE = -1e30  # finite additive mask bias (avoids -inf/NaN propagation)


# ----------------------------------------------------------------------------
# Generation-aware VMEM budget and tiling helpers
# ----------------------------------------------------------------------------
def _vmem_capacity_bytes():
    try:
        return int(pltpu.get_tpu_info().vmem_capacity_bytes)
    except Exception:
        return 64 * 1024 * 1024  # conservative (v7x-sized) fallback


_VMEM_CAPACITY = _vmem_capacity_bytes()
_BIG_VMEM = _VMEM_CAPACITY > 96 * 1024 * 1024            # v5e / v6e: 128 MiB physical
_VMEM_LIMIT_BYTES = (96 if _BIG_VMEM else 48) * 1024 * 1024


def _tile_and_pad(dim, candidates):
    """Pick a block size for `dim` plus the padded extent it must divide.

    Preference: an evenly-dividing preferred tile; a single full-extent block for small
    dims (always a legal block dim, stays small); otherwise a bounded 128-multiple tile
    with padding — never a huge full-dim block (keeps pipelining alive, VMEM bounded).
    """
    for c in candidates:
        if dim >= c and dim % c == 0:
            return c, dim
    if dim <= max(candidates):
        return dim, dim
    # Large, non-divisible dim: prefer the biggest tile whose padding waste is modest.
    for c in candidates:
        padded = ((dim + c - 1) // c) * c
        if padded - dim <= max(dim // 8, c // 4):
            return c, padded
    c = min(candidates)
    return c, ((dim + c - 1) // c) * c


# ----------------------------------------------------------------------------
# Kernel 1: fused multi-output projection  y_i = x @ W_i + b_i
#   x: [M, K], W_i: [K, N] (pre-transposed).  One x-tile read feeds n_out MXU matmuls.
# ----------------------------------------------------------------------------
def _fused_linear_kernel(*refs, n_out):
    x_ref = refs[0]
    wb_refs = refs[1:1 + 2 * n_out]                 # (w0, b0, w1, b1, ...)
    y_refs = refs[1 + 2 * n_out:1 + 3 * n_out]
    acc_refs = refs[1 + 3 * n_out:]
    kk = pl.program_id(2)

    @pl.when(kk == 0)
    def _init():
        for acc in acc_refs:
            acc[...] = jnp.zeros_like(acc)

    x = x_ref[...]                                  # one read, n_out matmuls
    for i in range(n_out):
        acc_refs[i][...] += jnp.dot(x, wb_refs[2 * i][...],
                                    preferred_element_type=jnp.float32)

    @pl.when(kk == pl.num_programs(2) - 1)
    def _finalize():
        for i in range(n_out):
            y_refs[i][...] = (acc_refs[i][...] + wb_refs[2 * i + 1][...]
                              ).astype(y_refs[i].dtype)


def fused_linear_pallas(x, weights_and_biases, out_dtype=None):
    """x: [B, L, Cin]; weights_and_biases: list of (w_t [Cin, Cout], b [Cout]).

    Returns a tuple of [B, L, Cout] outputs, one per weight set, sharing one read of x.
    """
    B, L, Cin = x.shape
    n_out = len(weights_and_biases)
    Cout = weights_and_biases[0][0].shape[1]
    M = B * L
    if out_dtype is None:
        out_dtype = x.dtype

    # v5e/v6e (128 MiB): big tiles to amortize per-step overhead and cut x re-reads.
    # v7x (64 MiB): smaller row tiles so double-buffering fits.
    if _BIG_VMEM:
        tm_c, tn_c, tk_c = (512, 256, 128), (512, 256, 128), (1024, 512, 256, 128)
    else:
        tm_c, tn_c, tk_c = (256, 128), (512, 256, 128), (512, 256, 128)
    tm, Mp = _tile_and_pad(M, tm_c)
    tn, Np = _tile_and_pad(Cout, tn_c)
    tk, Kp = _tile_and_pad(Cin, tk_c)

    x2 = x.reshape(M, Cin)                          # free reshape (row-major)
    if Mp != M or Kp != Cin:
        x2 = jnp.pad(x2, ((0, Mp - M), (0, Kp - Cin)))

    args = [x2]
    in_specs = [pl.BlockSpec((tm, tk), lambda i, j, k: (i, k))]
    for (w_t, b) in weights_and_biases:
        if Kp != Cin or Np != Cout:
            w_t = jnp.pad(w_t, ((0, Kp - Cin), (0, Np - Cout)))
        b2 = b.reshape(1, Cout).astype(jnp.float32)  # bias kept f32 (added to f32 acc)
        if Np != Cout:
            b2 = jnp.pad(b2, ((0, 0), (0, Np - Cout)))
        args.extend([w_t, b2])
        in_specs.append(pl.BlockSpec((tk, tn), lambda i, j, k: (k, j)))
        in_specs.append(pl.BlockSpec((1, tn), lambda i, j, k: (0, j)))

    outs = pl.pallas_call(
        functools.partial(_fused_linear_kernel, n_out=n_out),
        out_shape=tuple(jax.ShapeDtypeStruct((Mp, Np), out_dtype)
                        for _ in range(n_out)),
        grid_spec=pltpu.PrefetchScalarGridSpec(
            num_scalar_prefetch=0,
            grid=(Mp // tm, Np // tn, Kp // tk),
            in_specs=in_specs,
            out_specs=[pl.BlockSpec((tm, tn), lambda i, j, k: (i, j))
                       for _ in range(n_out)],
            scratch_shapes=[pltpu.VMEM((tm, tn), jnp.float32)
                            for _ in range(n_out)],
        ),
        compiler_params=pltpu.CompilerParams(
            dimension_semantics=("parallel", "parallel", "arbitrary"),
            vmem_limit_bytes=_VMEM_LIMIT_BYTES,
        ),
    )(*args)

    if not isinstance(outs, (tuple, list)):
        outs = (outs,)
    results = []
    for y in outs:
        if Mp != M or Np != Cout:
            y = y[:M, :Cout]
        results.append(y.reshape(B, L, Cout))
    return tuple(results)


# ----------------------------------------------------------------------------
# Kernel 2: flash-style multi-head attention
#   grid = (B, T//tq, S//ts); kv axis last ('arbitrary'); all heads per grid step.
#   q/k/v stay in lane-dense [B, L, C] layout; heads are static lane slices of C.
# ----------------------------------------------------------------------------
def _mha_kernel(*refs, n_heads, dims_per_head, activation, has_bias):
    if has_bias:
        q_ref, k_ref, v_ref, bias_ref, o_ref, acc_ref, m_ref, l_ref = refs
    else:
        q_ref, k_ref, v_ref, o_ref, acc_ref, m_ref, l_ref = refs
        bias_ref = None

    kv = pl.program_id(2)
    Dh = dims_per_head

    @pl.when(kv == 0)
    def _init():
        acc_ref[...] = jnp.zeros_like(acc_ref)
        if activation == "softmax":
            m_ref[...] = jnp.full_like(m_ref, -jnp.inf)
            l_ref[...] = jnp.zeros_like(l_ref)

    if has_bias:
        bias = bias_ref[...]                        # (1, ts) f32 additive (0 / -1e30)

    qk_dims = (((1,), (1,)), ((), ()))              # contract last dims: no K transpose

    if activation == "softmax":
        m_prev = m_ref[...]                         # one lane-dense (tq, H) load
        l_prev = l_ref[...]

    pv_parts, m_parts, l_parts, alpha_parts = [], [], [], []
    for h in range(n_heads):
        c0 = h * Dh
        # Per-head REF slices: no full-width (tq,C)/(ts,C) temporaries kept live.
        q_h = q_ref[:, c0:c0 + Dh]                  # (tq, Dh)
        k_h = k_ref[:, c0:c0 + Dh]                  # (ts, Dh)
        v_h = v_ref[:, c0:c0 + Dh]                  # (ts, Dh)

        s = lax.dot_general(q_h, k_h, qk_dims,
                            preferred_element_type=jnp.float32)   # (tq, ts) f32
        if has_bias:
            s = s + bias

        if activation == "softmax":
            # Online softmax, f32 stats. A row fully masked across ALL kv tiles
            # degenerates to a uniform average of V (torch yields NaN there).
            mp = m_prev[:, h:h + 1]
            m_new = jnp.maximum(mp, jnp.max(s, axis=-1, keepdims=True))
            alpha = jnp.exp(mp - m_new)
            p = jnp.exp(s - m_new)
            l_new = alpha * l_prev[:, h:h + 1] + jnp.sum(p, axis=-1, keepdims=True)
            m_parts.append(m_new)
            l_parts.append(l_new)
            alpha_parts.append(jnp.broadcast_to(alpha, (alpha.shape[0], Dh)))
            w = p
        elif activation == "sigmoid":
            w = jax.nn.sigmoid(s)                   # f32 elementwise
        elif activation == "none":
            w = s
        else:
            raise ValueError(f"Invalid activation '{activation}'")

        pv_parts.append(jnp.dot(w.astype(v_h.dtype), v_h,
                                preferred_element_type=jnp.float32))

    pv = jnp.concatenate(pv_parts, axis=-1)         # (tq, C) f32, head-packed

    # Single lane-dense scratch updates (no per-head masked partial stores).
    if activation == "softmax":
        m_ref[...] = jnp.concatenate(m_parts, axis=-1)           # (tq, H)
        l_ref[...] = jnp.concatenate(l_parts, axis=-1)           # (tq, H)
        alpha_full = jnp.concatenate(alpha_parts, axis=-1)       # (tq, C)
        acc_ref[...] = alpha_full * acc_ref[...] + pv
    else:
        acc_ref[...] = acc_ref[...] + pv

    @pl.when(kv == pl.num_programs(2) - 1)
    def _finalize():
        acc = acc_ref[...]
        if activation == "softmax":
            inv = 1.0 / l_ref[...]                  # exact reciprocal (finalize-only)
            inv_full = jnp.concatenate(
                [jnp.broadcast_to(inv[:, h:h + 1], (inv.shape[0], Dh))
                 for h in range(n_heads)], axis=-1)
            acc = acc * inv_full
        o_ref[...] = acc.astype(o_ref.dtype)        # one lane-dense (tq, C) store


def _attn_tile_candidates(C, itemsize):
    base = (512, 256, 128) if _BIG_VMEM else (256, 128)
    budget = int(_VMEM_LIMIT_BYTES * 0.6)
    ok = []
    for t in base:
        # double-buffered q/k/v/out blocks + f32 acc + ~6 f32 (t, t) score temporaries
        est = 2 * 4 * t * C * itemsize + t * C * 4 + 6 * t * t * 4
        if est <= budget:
            ok.append(t)
    return tuple(ok) if ok else (128,)


def attention_pallas(q, k, v, bias, n_heads, activation, out_dtype=None):
    """q: [B, T, C], k/v: [B, S, C], bias: [B, 1, S] f32 (0 / -1e30) or None -> [B, T, C]."""
    B, T, C = q.shape
    S = k.shape[1]
    Dh = C // n_heads
    if out_dtype is None:
        out_dtype = q.dtype

    cands = _attn_tile_candidates(C, q.dtype.itemsize)
    tq, Tp = _tile_and_pad(T, cands)
    ts, Sp = _tile_and_pad(S, cands)

    if Tp != T:                                     # zero-pad query rows; sliced below
        q = jnp.pad(q, ((0, 0), (0, Tp - T), (0, 0)))
    if Sp != S:                                     # pad keys/values; mask them via bias
        k = jnp.pad(k, ((0, 0), (0, Sp - S), (0, 0)))
        v = jnp.pad(v, ((0, 0), (0, Sp - S), (0, 0)))
        if bias is None:
            bias = jnp.zeros((B, 1, S), jnp.float32)
        bias = jnp.pad(bias, ((0, 0), (0, 0), (0, Sp - S)),
                       constant_values=_MASK_VALUE)

    has_bias = bias is not None

    kernel = functools.partial(_mha_kernel, n_heads=n_heads, dims_per_head=Dh,
                               activation=activation, has_bias=has_bias)

    in_specs = [
        pl.BlockSpec((None, tq, C), lambda b, i, kv: (b, i, 0)),
        pl.BlockSpec((None, ts, C), lambda b, i, kv: (b, kv, 0)),
        pl.BlockSpec((None, ts, C), lambda b, i, kv: (b, kv, 0)),
    ]
    args = [q, k, v]
    if has_bias:
        in_specs.append(pl.BlockSpec((None, 1, ts), lambda b, i, kv: (b, 0, kv)))
        args.append(bias)

    out = pl.pallas_call(
        kernel,
        out_shape=jax.ShapeDtypeStruct((B, Tp, C), out_dtype),
        grid_spec=pltpu.PrefetchScalarGridSpec(
            num_scalar_prefetch=0,
            grid=(B, Tp // tq, Sp // ts),
            in_specs=in_specs,
            out_specs=pl.BlockSpec((None, tq, C), lambda b, i, kv: (b, i, 0)),
            scratch_shapes=[
                pltpu.VMEM((tq, C), jnp.float32),        # head-packed output accumulator
                pltpu.VMEM((tq, n_heads), jnp.float32),  # running max per head
                pltpu.VMEM((tq, n_heads), jnp.float32),  # running denom per head
            ],
        ),
        compiler_params=pltpu.CompilerParams(
            dimension_semantics=("parallel", "parallel", "arbitrary"),
            vmem_limit_bytes=_VMEM_LIMIT_BYTES,
        ),
    )(*args)

    if Tp != T:
        out = out[:, :T, :]
    return out


# ----------------------------------------------------------------------------
# Module wrapper (parameter layout plumbing, mask bias, projection fusion)
# ----------------------------------------------------------------------------
def init_params(key, n_dims):
    """Weights stored pre-transposed as [C_in, C_out] (torch keeps [C_out, C_in])."""
    ks = jax.random.split(key, 6)
    bound = 1.0 / math.sqrt(n_dims)

    def lin(kw, kb):
        w = jax.random.uniform(kw, (n_dims, n_dims), jnp.float32, -bound, bound)
        b = jax.random.uniform(kb, (n_dims,), jnp.float32, -bound, bound)
        return w, b

    return {"q": lin(ks[0], ks[1]), "k": lin(ks[2], ks[3]), "v": lin(ks[4], ks[5])}


def multihead_attention(params, query, key, value, n_heads, activation,
                        key_mask=None, mxu_dtype=jnp.bfloat16):
    """query: [B, T, C], key/value: [B, S, C], key_mask: [B, S] bool (True = mask out).

    mxu_dtype: MXU matmul input dtype (bf16 by default — native MXU rate on v6e/v7x);
    accumulation, softmax math and the output stay f32 / query.dtype. Pass None for an
    all-f32 path.
    """
    if activation not in ("softmax", "sigmoid", "none"):
        raise ValueError(f"Invalid activation '{activation}'")

    B, T, C = query.shape
    S = key.shape[1]
    assert key.shape == value.shape, f"Shape mismatch: {key.shape}, {value.shape}"
    assert key.shape[0] == B and key.shape[2] == C, \
        f"Shape mismatch: {query.shape}, {key.shape}"
    Dh = C // n_heads
    assert Dh * n_heads == C

    out_dtype = query.dtype
    fuse_qkv = (query is key) and (key is value)
    fuse_kv = (not fuse_qkv) and (key is value)

    wq_t, bq = params["q"]
    wk_t, bk = params["k"]
    wv_t, bv = params["v"]

    # Fold 1/sqrt(Dh) query scaling into the Q projection (free; equivalent to scaling
    # q_proj(query) afterwards, up to bf16 rounding of W_q on the bf16 path).
    scale = 1.0 / math.sqrt(Dh)
    wq_t = wq_t * scale
    bq_s = bq * scale

    def cast(t):
        return t if (mxu_dtype is None or t.dtype == mxu_dtype) else t.astype(mxu_dtype)

    query_c = cast(query)
    key_c = query_c if (key is query) else cast(key)
    value_c = key_c if (value is key) else (query_c if (value is query) else cast(value))
    wq_t, wk_t, wv_t = cast(wq_t), cast(wk_t), cast(wv_t)
    act_dtype = query_c.dtype

    # Projections: one activation read feeds as many MXU matmuls as possible.
    if fuse_qkv:
        q, k, v = fused_linear_pallas(
            query_c, [(wq_t, bq_s), (wk_t, bk), (wv_t, bv)], out_dtype=act_dtype)
    elif fuse_kv:
        (q,) = fused_linear_pallas(query_c, [(wq_t, bq_s)], out_dtype=act_dtype)
        k, v = fused_linear_pallas(key_c, [(wk_t, bk), (wv_t, bv)], out_dtype=act_dtype)
    else:
        (q,) = fused_linear_pallas(query_c, [(wq_t, bq_s)], out_dtype=act_dtype)
        (k,) = fused_linear_pallas(key_c, [(wk_t, bk)], out_dtype=act_dtype)
        (v,) = fused_linear_pallas(value_c, [(wv_t, bv)], out_dtype=act_dtype)

    # Additive key-mask bias (finite large negative instead of -inf). None -> the
    # attention kernel takes no bias input at all (no DMA, no per-head VPU add).
    # Note: activation='none' with a mask yields huge finite values where torch gives
    # inf/NaN — documented divergence.
    bias = None
    if key_mask is not None:
        bias = jnp.where(key_mask, _MASK_VALUE, 0.0).astype(jnp.float32)[:, None, :]

    return attention_pallas(q, k, v, bias, n_heads, activation, out_dtype=out_dtype)


# ----------------------------------------------------------------------------
# Pure-JAX reference (torch-faithful, for correctness check)
# ----------------------------------------------------------------------------
def reference(params, query, key, value, n_heads, activation, key_mask=None):
    B, T, C = query.shape
    S = key.shape[1]
    Dh = C // n_heads

    def lin(x, wb):
        w, b = wb            # w is [C_in, C_out]
        return x @ w + b

    q = lin(query, params["q"]).reshape(B, T, n_heads, Dh).transpose(0, 2, 1, 3)
    k = lin(key, params["k"]).reshape(B, S, n_heads, Dh).transpose(0, 2, 1, 3)
    v = lin(value, params["v"]).reshape(B, S, n_heads, Dh).transpose(0, 2, 1, 3)
    q = q / math.sqrt(Dh)
    scores = jnp.einsum("bhtd,bhsd->bhts", q, k)
    if key_mask is not None:
        scores = jnp.where(key_mask[:, None, None, :], -jnp.inf, scores)
    if activation == "softmax":
        wts = jax.nn.softmax(scores, axis=-1)
    elif activation == "sigmoid":
        wts = jax.nn.sigmoid(scores)
    else:
        wts = scores
    out = jnp.einsum("bhts,bhsd->bhtd", wts, v)
    return out.transpose(0, 2, 1, 3).reshape(B, T, C)


if __name__ == "__main__":
    B, T, S, C, H = 2, 8, 8, 32, 4

    root = jax.random.PRNGKey(0)
    kp, kq, kk, kvv, km = jax.random.split(root, 5)

    params = init_params(kp, C)
    query = jax.random.normal(kq, (B, T, C), jnp.float32)
    key = jax.random.normal(kk, (B, S, C), jnp.float32)
    value = jax.random.normal(kvv, (B, S, C), jnp.float32)
    # Mask a few key positions per batch (True = mask out), never a full row.
    key_mask = jax.random.bernoulli(km, 0.25, (B, S)).at[:, 0].set(False)

    ref = reference(params, query, key, value, H, "softmax", key_mask)

    # 1) Default bf16-MXU path: softmax + mask, distinct key/value.
    out = jax.block_until_ready(
        multihead_attention(params, query, key, value, H, "softmax", key_mask))
    assert out.shape == (B, T, C) and out.dtype == query.dtype
    assert bool(jnp.allclose(out, ref, atol=7e-2, rtol=7e-2)), "softmax (bf16) mismatch"

    # 2) All-f32 path (exact reciprocal in finalize -> tight tolerance).
    out_f32 = jax.block_until_ready(
        multihead_attention(params, query, key, value, H, "softmax", key_mask,
                            mxu_dtype=None))
    assert bool(jnp.allclose(out_f32, ref, atol=2e-3, rtol=2e-3)), "softmax (f32) mismatch"

    # 3) key is value -> fused K/V projection kernel.
    out_kv = jax.block_until_ready(
        multihead_attention(params, query, key, key, H, "softmax", key_mask))
    ref_kv = reference(params, query, key, key, H, "softmax", key_mask)
    assert bool(jnp.allclose(out_kv, ref_kv, atol=7e-2, rtol=7e-2)), "fused-KV mismatch"

    # 4) query is key is value -> fused Q/K/V projection kernel (self-attention),
    #    and the no-mask (no-bias-input) attention path.
    out_sa = jax.block_until_ready(
        multihead_attention(params, query, query, query, H, "softmax", None))
    ref_sa = reference(params, query, query, query, H, "softmax", None)
    assert bool(jnp.allclose(out_sa, ref_sa, atol=7e-2, rtol=7e-2)), "fused-QKV mismatch"

    # 5) sigmoid / none paths, no mask (f32 for tight comparison).
    for act in ("sigmoid", "none"):
        o = jax.block_until_ready(
            multihead_attention(params, query, key, value, H, act, None,
                                mxu_dtype=None))
        r = reference(params, query, key, value, H, act, None)
        assert bool(jnp.allclose(o, r, atol=1e-4, rtol=1e-4)), f"mismatch ({act})"

    print("KERNEL_OK")
</pallas_src>

<mosaic_0001>
module attributes {stable_mosaic.version = 11 : i64} {
  func.func @_fused_linear_kernel(%arg0: i32, %arg1: i32, %arg2: i32, %arg3: memref<16x32xbf16, #tpu.memory_space<vmem>>, %arg4: memref<32x32xbf16, #tpu.memory_space<vmem>>, %arg5: memref<1x32xf32, #tpu.memory_space<vmem>>, %arg6: memref<16x32xbf16, #tpu.memory_space<vmem>>, %arg7: memref<16x32xf32, #tpu.memory_space<vmem>>) attributes {dimension_semantics = [#tpu.dimension_semantics<parallel>, #tpu.dimension_semantics<parallel>, #tpu.dimension_semantics<arbitrary>], iteration_bounds = array<i64: 1, 1, 1>, scalar_prefetch = 0 : i64, scratch_operands = 1 : i64, tpu.core_type = #tpu.core_type<tc>, window_params = [{transform_indices = @transform_0, window_bounds = array<i64: 16, 32>}, {transform_indices = @transform_1, window_bounds = array<i64: 32, 32>}, {transform_indices = @transform_2, window_bounds = array<i64: 1, 32>}, {transform_indices = @transform_3, window_bounds = array<i64: 16, 32>}]} {
    %c0_i32 = arith.constant 0 : i32
    %0 = arith.cmpi eq, %arg2, %c0_i32 : i32
    %1 = arith.extui %0 : i1 to i32
    %c0_i32_0 = arith.constant 0 : i32
    %2 = arith.cmpi ne, %1, %c0_i32_0 : i32
    scf.if %2 {
      %cst_10 = arith.constant 0.000000e+00 : f32
      %12 = vector.broadcast %cst_10 : f32 to vector<16x32xf32>
      %c0_11 = arith.constant 0 : index
      %c0_12 = arith.constant 0 : index
      %13 = vector.load %arg7[%c0_11, %c0_12] : memref<16x32xf32, #tpu.memory_space<vmem>>, vector<16x32xf32>
      tpu.vector_store %arg7[%c0_11, %c0_12], %12 {strides = array<i32>} : memref<16x32xf32, #tpu.memory_space<vmem>>, vector<16x32xf32>,
    } else {
    }
    %c0 = arith.constant 0 : index
    %c0_1 = arith.constant 0 : index
    %3 = vector.load %arg3[%c0, %c0_1] : memref<16x32xbf16, #tpu.memory_space<vmem>>, vector<16x32xbf16>
    %c0_2 = arith.constant 0 : index
    %c0_3 = arith.constant 0 : index
    %4 = vector.load %arg7[%c0_2, %c0_3] : memref<16x32xf32, #tpu.memory_space<vmem>>, vector<16x32xf32>
    %c0_4 = arith.constant 0 : index
    %c0_5 = arith.constant 0 : index
    %5 = vector.load %arg4[%c0_4, %c0_5] : memref<32x32xbf16, #tpu.memory_space<vmem>>, vector<32x32xbf16>
    %cst = arith.constant dense<0.000000e+00> : vector<16x32xf32>
    %6 = tpu.matmul %3, %5, %cst {dimension_numbers = #tpu.dot_dimension_numbers<[1], [0], [0], [1], [0, 0, 1, 1], [], []>} : vector<16x32xbf16>, vector<32x32xbf16>, vector<16x32xf32> -> vector<16x32xf32>
    %7 = arith.addf %4, %6 : vector<16x32xf32>
    %c0_6 = arith.constant 0 : index
    %c0_7 = arith.constant 0 : index
    %8 = vector.load %arg7[%c0_6, %c0_7] : memref<16x32xf32, #tpu.memory_space<vmem>>, vector<16x32xf32>
    tpu.vector_store %arg7[%c0_6, %c0_7], %7 {strides = array<i32>} : memref<16x32xf32, #tpu.memory_space<vmem>>, vector<16x32xf32>,
    %c0_i32_8 = arith.constant 0 : i32
    %9 = arith.cmpi eq, %arg2, %c0_i32_8 : i32
    %10 = arith.extui %9 : i1 to i32
    %c0_i32_9 = arith.constant 0 : i32
    %11 = arith.cmpi ne, %10, %c0_i32_9 : i32
    scf.if %11 {
      %c0_10 = arith.constant 0 : index
      %c0_11 = arith.constant 0 : index
      %12 = vector.load %arg7[%c0_10, %c0_11] : memref<16x32xf32, #tpu.memory_space<vmem>>, vector<16x32xf32>
      %c0_12 = arith.constant 0 : index
      %c0_13 = arith.constant 0 : index
      %13 = vector.load %arg5[%c0_12, %c0_13] : memref<1x32xf32, #tpu.memory_space<vmem>>, vector<1x32xf32>
      %14 = vector.broadcast %13 : vector<1x32xf32> to vector<16x32xf32>
      %15 = arith.addf %12, %14 : vector<16x32xf32>
      %16 = arith.truncf %15 : vector<16x32xf32> to vector<16x32xbf16>
      %c0_14 = arith.constant 0 : index
      %c0_15 = arith.constant 0 : index
      %17 = vector.load %arg6[%c0_14, %c0_15] : memref<16x32xbf16, #tpu.memory_space<vmem>>, vector<16x32xbf16>
      tpu.vector_store %arg6[%c0_14, %c0_15], %16 {strides = array<i32>} : memref<16x32xbf16, #tpu.memory_space<vmem>>, vector<16x32xbf16>,
    } else {
    }
    return
  }
  func.func @transform_0(%arg0: i32, %arg1: i32, %arg2: i32) -> (i32, i32) {
    %c0_i32 = arith.constant 0 : i32
    return %arg0, %arg2 : i32, i32
  }
  func.func @transform_1(%arg0: i32, %arg1: i32, %arg2: i32) -> (i32, i32) {
    %c0_i32 = arith.constant 0 : i32
    return %arg2, %arg1 : i32, i32
  }
  func.func @transform_2(%arg0: i32, %arg1: i32, %arg2: i32) -> (i32, i32) {
    %c0_i32 = arith.constant 0 : i32
    %c0_i32_0 = arith.constant 0 : i32
    return %c0_i32, %arg1 : i32, i32
  }
  func.func @transform_3(%arg0: i32, %arg1: i32, %arg2: i32) -> (i32, i32) {
    %c0_i32 = arith.constant 0 : i32
    return %arg0, %arg1 : i32, i32
  }
}

</mosaic_0001>

<llo_original>
// kernel: tpu_custom_call.1
$region0: #{tpu_custom_call.1}
  #allocation0 [shape = 'u32[]', space=smem, size = 0x4, offset = 0x4, fixed_abs, tag = 'smem constant byte address 0x4 - core index']
  #allocation1 [shape = 'u32[72,128]{1,0:T(1,128)}', space=vmem, size = 0x9000, scoped, tag = 'internal scratch']
  #allocation2 [shape = 'f32[16,32]{1,0:T(8,128)}', space=vmem, size = 0x2000, scoped, tag = 'scratch operand']
  %s0 = inlined_call_operand.hbm [shape: bf16[16,32], index: 0, kind: input, shape index: {}]
  %s1 = inlined_call_operand.hbm [shape: bf16[32,32], index: 1, kind: input, shape index: {}]
  %s2 = inlined_call_operand.vmem [shape: f32[1,32], index: 2, kind: input, shape index: {}]
  %s3 = inlined_call_operand.hbm [shape: bf16[16,32], index: 3, kind: output, shape index: {}]
  %s4 = sld [smem:[#allocation0]]
  $region38: #{tpu_custom_call.1} parent=0
    _
  %s6 = ssub.s32 1, %s4
  %s7 = scalar_select 0, %s6, %s4
  $region1: #{tpu_custom_call.1} parent=0
    #allocation3 [shape = 'u8[4096]{0}', space=vmem, size = 0x1000, scoped, tag = 'input window, operand 0, single buffered']
    #allocation4 [shape = 's32[1]{0}', space=sflag, size = 0x4, scoped, tag = 'scoped memory for tpu_custom_call.1']
    #allocation5 [shape = 's32[1]{0}', space=sflag, size = 0x4, scoped, tag = 'scoped memory for tpu_custom_call.1']
    #allocation6 [shape = 'u8[8192]{0}', space=vmem, size = 0x2000, scoped, tag = 'input window, operand 1, single buffered']
    #allocation7 [shape = 's32[1]{0}', space=sflag, size = 0x4, scoped, tag = 'scoped memory for tpu_custom_call.1']
    #allocation8 [shape = 'u8[4096]{0}', space=vmem, size = 0x1000, scoped, tag = 'output window, operand 0, single buffered']
    %8 = vsyncpa [#allocation4], 0
    %9 = vsyncpa [#allocation7], 0
    %10 = vsyncpa [#allocation5], 0
    // Predicated region
    $region2: #{tpu_custom_call.1} parent=1 // pred_check
      _
    $region3: #{tpu_custom_call.1} parent=1 // pred_check_branch
      %12 = sbr.rel (0) target = $region5
    $region4: #{tpu_custom_call.1} parent=1 // pred_region
      %14 = vsyncadd [#allocation4], 0
      %s15 = sshll.u32 %s0, 4
      %s16 = int_to_ptr.hbm [resolvable:$true] %s15
      %s17 = sshll.u32 [#allocation3], 4
      %s18 = int_to_ptr.vmem [resolvable:$true] %s17
      %23 = dma.hbm_to_vmem [thread:$0]  %s16, 128, %s18, [#allocation4], 64, 64, 4
    $region5: #{tpu_custom_call.1} parent=1 // pred_fallthru
      _
    // Predicated region
    $region6: #{tpu_custom_call.1} parent=1 // pred_check
      _
    $region7: #{tpu_custom_call.1} parent=1 // pred_check_branch
      %25 = sbr.rel (0) target = $region9
    $region8: #{tpu_custom_call.1} parent=1 // pred_region
      %27 = vsyncadd [#allocation7], 0
      %s28 = sshll.u32 %s1, 4
      %s29 = int_to_ptr.hbm [resolvable:$true] %s28
      %s30 = sshll.u32 [#allocation6], 4
      %s31 = int_to_ptr.vmem [resolvable:$true] %s30
      %36 = dma.hbm_to_vmem [thread:$0]  %s29, 256, %s31, [#allocation7], 64, 64, 4
    $region9: #{tpu_custom_call.1} parent=1 // pred_fallthru
      _
    // Predicated region
    $region10: #{tpu_custom_call.1} parent=1 // pred_check
      _
    $region11: #{tpu_custom_call.1} parent=1 // pred_check_branch
      %38 = sbr.rel (0) target = $region13
    $region12: #{tpu_custom_call.1} parent=1 // pred_region
      _
    $region13: #{tpu_custom_call.1} parent=1 // pred_fallthru
      _
    // Predicated region
    $region14: #{tpu_custom_call.1} parent=1 // pred_check
      _
    $region15: #{tpu_custom_call.1} parent=1 // pred_check_branch
      %40 = sbr.rel (0) target = $region17
    $region16: #{tpu_custom_call.1} parent=1 // pred_region
      %42 = dma.done [#allocation4], 128
    $region17: #{tpu_custom_call.1} parent=1 // pred_fallthru
      _
    // Predicated region
    $region18: #{tpu_custom_call.1} parent=1 // pred_check
      _
    $region19: #{tpu_custom_call.1} parent=1 // pred_check_branch
      %44 = sbr.rel (0) target = $region21
    $region20: #{tpu_custom_call.1} parent=1 // pred_region
      %46 = dma.done [#allocation7], 256
    $region21: #{tpu_custom_call.1} parent=1 // pred_fallthru
      _
    %p48 = scmp.eq.s32.totalorder 0, 0
    // Predicated region
    $region22: #{tpu_custom_call.1} parent=1 // pred_check
      %p49 = pneg %p48
    $region23: #{tpu_custom_call.1} parent=1 // pred_check_branch
      %51 = sbr.rel (%p49) target = $region25
    $region24: #{tpu_custom_call.1} parent=1 // pred_region
      %vm52 = vcmask 261120
      %53 = vst.msk [vmem:[#allocation2] sm:$0xff] %vm52, 0.0
      %54 = vst.msk [vmem:[#allocation2 + $0x8] sm:$0xff] %vm52, 0.0
    $region25: #{tpu_custom_call.1} parent=1 // pred_fallthru
      _
    %v55 = vld [vmem:[#allocation3] sm:$0xf]
    %v56 = vld [vmem:[#allocation3 + $0x4] sm:$0xf]
    %v57 = vld [vmem:[#allocation2] sm:$0xff]
    %v58 = vld [vmem:[#allocation2 + $0x8] sm:$0xff]
    %v59 = vld [vmem:[#allocation6] sm:$0xf]
    %v60 = vld [vmem:[#allocation6 + $0x4] sm:$0xf]
    %v61 = vld [vmem:[#allocation6 + $0x8] sm:$0xf]
    %v62 = vld [vmem:[#allocation6 + $0xc] sm:$0xf]
    %v65 = vunpack.c.l.b16 %v55
    %v66 = vunpack.c.l.b16 %v56
    %v67 = vpack.c.b16 %v66, %v65
    %v72 = vunpack.c.l.b16 %v59
    %v73 = vunpack.c.l.b16 %v60
    %v74 = vunpack.c.l.b16 %v61
    %v75 = vunpack.c.l.b16 %v62
    %v76 = vpack.c.b16 %v73, %v72
    %v77 = vpack.c.b16 %v75, %v74
    %vm80 = vcmask 261120
    %v82 = vsel %vm80, %v67, 0
    %84 = vmatpush.bf16.msra.mxu0 0
    %85 = vmatpush.bf16.msra.mxu0 0
    %86 = vmatpush.bf16.msra.mxu0 0
    %87 = vmatpush.bf16.msra.mxu0 0
    %88 = vmatpush.bf16.msra.mxu0 0
    %89 = vmatpush.bf16.msra.mxu0 0
    %90 = vmatpush.bf16.msra.mxu0 %v77
    %91 = vmatpush.bf16.msra.mxu0 %v76
    %92 = vmatmul.bf16.gmra.mxu0 %v82
    %v93 = vpop.f32.mrf.mxu0
    %v94 = vadd.f32 0.0, %v93
    %v95 = vpop.f32.mrf.mxu0
    %v96 = vadd.f32 0.0, %v95
    %97 = vdwg.mxu0
    %v98 = vadd.f32 %v57, %v94
    %v99 = vadd.f32 %v58, %v96
    %100 = vst.msk [vmem:[#allocation2] sm:$0xff] %vm80, %v98
    %101 = vst.msk [vmem:[#allocation2 + $0x8] sm:$0xff] %vm80, %v99
    // Predicated region
    $region26: #{tpu_custom_call.1} parent=1 // pred_check
      %p102 = pneg %p48
    $region27: #{tpu_custom_call.1} parent=1 // pred_check_branch
      %104 = sbr.rel (%p102) target = $region29
    $region28: #{tpu_custom_call.1} parent=1 // pred_region
      %v105 = vld [vmem:[#allocation2] sm:$0xff]
      %v106 = vld [vmem:[#allocation2 + $0x8] sm:$0xff]
      %v107 = vld [vmem:[%s2] sm:$0x1]
      %v109 = vperm.slane %v107, 0
      %v111 = vadd.f32 %v105, %v109
      %v112 = vadd.f32 %v106, %v109
      %v113 = vpack.c.bf16 %v111, %v111
      %v114 = vpack.c.bf16 %v112, %v112
      %vm115 = vcmask 257024
      %116 = vst.msk [vmem:[#allocation8] sm:$0xf] %vm115, %v113
      %117 = vst.msk [vmem:[#allocation8 + $0x4] sm:$0xf] %vm115, %v114
    $region29: #{tpu_custom_call.1} parent=1 // pred_fallthru
      _
    // Predicated region
    $region30: #{tpu_custom_call.1} parent=1 // pred_check
      _
    $region31: #{tpu_custom_call.1} parent=1 // pred_check_branch
      %119 = sbr.rel (0) target = $region33
    $region32: #{tpu_custom_call.1} parent=1 // pred_region
      %121 = vsyncadd [#allocation5], 0
      %s122 = sshll.u32 [#allocation8], 4
      %s123 = int_to_ptr.vmem [resolvable:$true] %s122
      %s124 = sshll.u32 %s3, 4
      %s125 = int_to_ptr.hbm [resolvable:$true] %s124
      %130 = dma.vmem_to_hbm [thread:$0]  %s123, 128, %s125, [#allocation5], 64, 64, 4
    $region33: #{tpu_custom_call.1} parent=1 // pred_fallthru
      _
    // Predicated region
    $region34: #{tpu_custom_call.1} parent=1 // pred_check
      _
    $region35: #{tpu_custom_call.1} parent=1 // pred_check_branch
      %132 = sbr.rel (0) target = $region37
    $region36: #{tpu_custom_call.1} parent=1 // pred_region
      %134 = dma.done [#allocation5], 128
    $region37: #{tpu_custom_call.1} parent=1 // pred_fallthru
      _
    %135 = vsyncpa [#allocation4], 1
    %136 = vsyncpa [#allocation7], 1
    %137 = vsyncpa [#allocation5], 1

</llo_original>
